<compile_context>
chip_gen: v5e
topology: v5e:2x2
jax: 0.10.0
libtpu: 0.0.40
codegen_flags: <defaults>
</compile_context>

<pallas_src>
import jax
import jax.numpy as jnp
from jax.experimental import pallas as pl
from jax.experimental.pallas import tpu as pltpu

LANES = 128
PREFERRED_ROW_TILE = 4096   # 4096 x 128 x 4B = 2 MiB per f32 input buffer
NUM_CORES = 2               # split reduction across TensorCores (v7x); harmless on 1-TC chips


def _make_sse_kernel(rows, row_tile, steps_per_core, need_mask):
    """Build the sum-of-squared-error kernel specialized for static sizes."""

    def kernel(x_ref, y_ref, o_ref, acc_ref):
        i = pl.program_id(1)

        @pl.when(i == 0)
        def _init():
            acc_ref[...] = jnp.zeros_like(acc_ref)

        # Cast on-chip (VPU); HBM streams the original dtype.
        d = x_ref[...].astype(jnp.float32) - y_ref[...].astype(jnp.float32)

        if need_mask:
            # Global (unclamped) block index; rows past the logical end — the
            # garbage tail of a partial edge block, or a fully out-of-range
            # padding step when blocks don't split evenly across cores —
            # contribute exactly 0.
            blk = pl.program_id(0) * steps_per_core + i
            row_ids = blk * row_tile + jax.lax.broadcasted_iota(
                jnp.int32, (row_tile, LANES), 0)
            d = jnp.where(row_ids < rows, d, 0.0)

        acc_ref[...] += d * d    # pure VPU work; DMA stays the bottleneck

        @pl.when(i == steps_per_core - 1)
        def _finalize():
            # Pairwise fold-in-half reduction over the sublane axis: log-depth
            # summation is far more accurate than one long sequential sum and
            # keeps every slice (8,·)-aligned.  Static Python loop — fully
            # unrolled at trace time.
            r = row_tile
            while r > 8 and r % 16 == 0:
                h = r // 2
                acc_ref[0:h, :] = acc_ref[0:h, :] + acc_ref[h:r, :]
                r = h
            if r == 8:
                o_ref[...] = acc_ref[0:8, :]
            else:
                o_ref[...] = jnp.zeros_like(o_ref)
                o_ref[0:1, :] = jnp.sum(acc_ref[0:r, :], axis=0, keepdims=True)

    return kernel


def _sum_squared_error_2d(x2d: jax.Array, y2d: jax.Array) -> jax.Array:
    """SSE over a (rows, 128) slab (original dtype), computed in f32."""
    rows, cols = x2d.shape
    assert cols == LANES and rows > 0

    row_tile = min(PREFERRED_ROW_TILE, rows)   # full-dim block if the array is small
    nb = pl.cdiv(rows, row_tile)               # total blocks
    num_cores = min(NUM_CORES, nb)
    spc = pl.cdiv(nb, num_cores)               # grid steps per core

    need_clamp = (num_cores * spc) != nb       # padding steps exist
    need_mask = (rows != nb * row_tile) or need_clamp

    if need_clamp:
        def in_map(c, i):
            # Keep the DMA in bounds for padding steps; they are fully masked
            # inside the kernel so they contribute 0.
            return (jnp.minimum(c * spc + i, nb - 1), 0)
    else:
        def in_map(c, i):
            return (c * spc + i, 0)

    kernel = _make_sse_kernel(rows, row_tile, spc, need_mask)

    partials = pl.pallas_call(
        kernel,
        out_shape=jax.ShapeDtypeStruct((num_cores * 8, LANES), jnp.float32),
        grid_spec=pltpu.PrefetchScalarGridSpec(
            num_scalar_prefetch=0,
            grid=(num_cores, spc),
            in_specs=[
                pl.BlockSpec((row_tile, LANES), in_map),
                pl.BlockSpec((row_tile, LANES), in_map),
            ],
            out_specs=pl.BlockSpec((8, LANES), lambda c, i: (c, 0)),
            scratch_shapes=[pltpu.VMEM((row_tile, LANES), jnp.float32)],
        ),
        compiler_params=pltpu.CompilerParams(
            dimension_semantics=("parallel", "arbitrary"),
        ),
    )(x2d, y2d)

    return jnp.sum(partials)


def rmse_loss(x: jax.Array, y: jax.Array, eps: float = 1e-06) -> jax.Array:
    """Matches torch: sqrt(MSELoss()(x, y) + eps). Returns an f32 scalar."""
    assert x.shape == y.shape
    n_elem = x.size
    assert n_elem > 0

    xf = x.reshape(-1)   # free reshape; keep original dtype (no HBM copy)
    yf = y.reshape(-1)

    n_lane = (n_elem // LANES) * LANES
    rows = n_lane // LANES

    sse = jnp.float32(0.0)
    if rows > 0:
        if n_lane == n_elem:
            x2d = xf.reshape(rows, LANES)   # zero-copy reshape, no padding
            y2d = yf.reshape(rows, LANES)
        else:
            # Rare case (n_elem not a multiple of 128): prefix slice may copy.
            x2d = jax.lax.slice(xf, (0,), (n_lane,)).reshape(rows, LANES)
            y2d = jax.lax.slice(yf, (0,), (n_lane,)).reshape(rows, LANES)
        sse = _sum_squared_error_2d(x2d, y2d)

    if n_lane != n_elem:
        # Tiny (<128 element) tail handled in plain JAX instead of padding the
        # whole array.
        xt = jax.lax.slice(xf, (n_lane,), (n_elem,)).astype(jnp.float32)
        yt = jax.lax.slice(yf, (n_lane,), (n_elem,)).astype(jnp.float32)
        sse = sse + jnp.sum((xt - yt) ** 2)

    mse = sse / jnp.float32(n_elem)
    return jnp.sqrt(mse + jnp.float32(eps))


def _check(loss, x, y, name):
    ref = jnp.sqrt(jnp.mean((x.astype(jnp.float32) - y.astype(jnp.float32)) ** 2)
                   + 1e-06)
    # f32 reductions in different orders legitimately differ by ~1e-5 relative
    # at these sizes; rtol=1e-4 is the standard bar for an f32 scalar loss.
    assert jnp.allclose(loss, ref, rtol=1e-4, atol=1e-6), (name, loss, ref)


if __name__ == "__main__":
    rmse = jax.jit(rmse_loss)
    key = jax.random.PRNGKey(0)

    # 1) Small NCDHW shape consistent with the surrounding 3-D conv model:
    #    single block, exact (rows*128) fit.
    kx, ky = jax.random.split(key)
    x = jax.random.normal(kx, (2, 4, 8, 16, 16), dtype=jnp.float32)
    y = jax.random.normal(ky, (2, 4, 8, 16, 16), dtype=jnp.float32)
    loss = jax.block_until_ready(rmse(x, y))
    _check(loss, x, y, "case1")

    # 2) Single full-dim (non-tile-multiple) block — exercises the fold epilogue
    #    with a non-power-of-two row count.
    k2x, k2y = jax.random.split(jax.random.PRNGKey(1))
    x2 = jax.random.normal(k2x, (2, 4, 33, 32, 32), dtype=jnp.float32)
    y2 = jax.random.normal(k2y, (2, 4, 33, 32, 32), dtype=jnp.float32)
    loss2 = jax.block_until_ready(rmse(x2, y2))
    _check(loss2, x2, y2, "case2")

    # 3) Multi-block / two-core / masked partial-edge-block path (5760 rows).
    k3x, k3y = jax.random.split(jax.random.PRNGKey(2))
    x3 = jax.random.normal(k3x, (2, 4, 40, 48, 48), dtype=jnp.float32)
    y3 = jax.random.normal(k3y, (2, 4, 40, 48, 48), dtype=jnp.float32)
    loss3 = jax.block_until_ready(rmse(x3, y3))
    _check(loss3, x3, y3, "case3")

    # 4) Element count not a multiple of 128 — exercises the plain-JAX tail path.
    k4x, k4y = jax.random.split(jax.random.PRNGKey(3))
    x4 = jax.random.normal(k4x, (3, 5, 7, 11), dtype=jnp.float32)
    y4 = jax.random.normal(k4y, (3, 5, 7, 11), dtype=jnp.float32)
    loss4 = jax.block_until_ready(rmse(x4, y4))
    _check(loss4, x4, y4, "case4")

    print("KERNEL_OK")
</pallas_src>

<mosaic_0001>
module attributes {stable_mosaic.version = 11 : i64} {
  func.func @kernel(%arg0: i32, %arg1: i32, %arg2: memref<128x128xf32, #tpu.memory_space<vmem>>, %arg3: memref<128x128xf32, #tpu.memory_space<vmem>>, %arg4: memref<8x128xf32, #tpu.memory_space<vmem>>, %arg5: memref<128x128xf32, #tpu.memory_space<vmem>>) attributes {dimension_semantics = [#tpu.dimension_semantics<parallel>, #tpu.dimension_semantics<arbitrary>], iteration_bounds = array<i64: 1, 1>, scalar_prefetch = 0 : i64, scratch_operands = 1 : i64, tpu.core_type = #tpu.core_type<tc>, window_params = [{transform_indices = @transform_0, window_bounds = array<i64: 128, 128>}, {transform_indices = @transform_1, window_bounds = array<i64: 128, 128>}, {transform_indices = @transform_2, window_bounds = array<i64: 8, 128>}]} {
    %c0_i32 = arith.constant 0 : i32
    %0 = arith.cmpi eq, %arg1, %c0_i32 : i32
    %1 = arith.extui %0 : i1 to i32
    %c0_i32_0 = arith.constant 0 : i32
    %2 = arith.cmpi ne, %1, %c0_i32_0 : i32
    scf.if %2 {
      %cst = arith.constant 0.000000e+00 : f32
      %13 = vector.broadcast %cst : f32 to vector<128x128xf32>
      %c0_10 = arith.constant 0 : index
      %c0_11 = arith.constant 0 : index
      %14 = vector.load %arg5[%c0_10, %c0_11] : memref<128x128xf32, #tpu.memory_space<vmem>>, vector<128x128xf32>
      tpu.vector_store %arg5[%c0_10, %c0_11], %13 {strides = array<i32>} : memref<128x128xf32, #tpu.memory_space<vmem>>, vector<128x128xf32>,
    } else {
    }
    %c0 = arith.constant 0 : index
    %c0_1 = arith.constant 0 : index
    %3 = vector.load %arg2[%c0, %c0_1] : memref<128x128xf32, #tpu.memory_space<vmem>>, vector<128x128xf32>
    %c0_2 = arith.constant 0 : index
    %c0_3 = arith.constant 0 : index
    %4 = vector.load %arg3[%c0_2, %c0_3] : memref<128x128xf32, #tpu.memory_space<vmem>>, vector<128x128xf32>
    %5 = arith.subf %3, %4 : vector<128x128xf32>
    %c0_4 = arith.constant 0 : index
    %c0_5 = arith.constant 0 : index
    %6 = vector.load %arg5[%c0_4, %c0_5] : memref<128x128xf32, #tpu.memory_space<vmem>>, vector<128x128xf32>
    %7 = arith.mulf %5, %5 : vector<128x128xf32>
    %8 = arith.addf %6, %7 : vector<128x128xf32>
    %c0_6 = arith.constant 0 : index
    %c0_7 = arith.constant 0 : index
    %9 = vector.load %arg5[%c0_6, %c0_7] : memref<128x128xf32, #tpu.memory_space<vmem>>, vector<128x128xf32>
    tpu.vector_store %arg5[%c0_6, %c0_7], %8 {strides = array<i32>} : memref<128x128xf32, #tpu.memory_space<vmem>>, vector<128x128xf32>,
    %c0_i32_8 = arith.constant 0 : i32
    %10 = arith.cmpi eq, %arg1, %c0_i32_8 : i32
    %11 = arith.extui %10 : i1 to i32
    %c0_i32_9 = arith.constant 0 : i32
    %12 = arith.cmpi ne, %11, %c0_i32_9 : i32
    scf.if %12 {
      %c0_10 = arith.constant 0 : index
      %c0_11 = arith.constant 0 : index
      %13 = vector.load %arg5[%c0_10, %c0_11] : memref<128x128xf32, #tpu.memory_space<vmem>>, vector<64x128xf32>
      %c64 = arith.constant 64 : index
      %c0_12 = arith.constant 0 : index
      %14 = vector.load %arg5[%c64, %c0_12] : memref<128x128xf32, #tpu.memory_space<vmem>>, vector<64x128xf32>
      %15 = arith.addf %13, %14 : vector<64x128xf32>
      %c0_13 = arith.constant 0 : index
      %c0_14 = arith.constant 0 : index
      %16 = vector.load %arg5[%c0_13, %c0_14] : memref<128x128xf32, #tpu.memory_space<vmem>>, vector<64x128xf32>
      tpu.vector_store %arg5[%c0_13, %c0_14], %15 {strides = array<i32>} : memref<128x128xf32, #tpu.memory_space<vmem>>, vector<64x128xf32>,
      %c0_15 = arith.constant 0 : index
      %c0_16 = arith.constant 0 : index
      %17 = vector.load %arg5[%c0_15, %c0_16] : memref<128x128xf32, #tpu.memory_space<vmem>>, vector<32x128xf32>
      %c32 = arith.constant 32 : index
      %c0_17 = arith.constant 0 : index
      %18 = vector.load %arg5[%c32, %c0_17] : memref<128x128xf32, #tpu.memory_space<vmem>>, vector<32x128xf32>
      %19 = arith.addf %17, %18 : vector<32x128xf32>
      %c0_18 = arith.constant 0 : index
      %c0_19 = arith.constant 0 : index
      %20 = vector.load %arg5[%c0_18, %c0_19] : memref<128x128xf32, #tpu.memory_space<vmem>>, vector<32x128xf32>
      tpu.vector_store %arg5[%c0_18, %c0_19], %19 {strides = array<i32>} : memref<128x128xf32, #tpu.memory_space<vmem>>, vector<32x128xf32>,
      %c0_20 = arith.constant 0 : index
      %c0_21 = arith.constant 0 : index
      %21 = vector.load %arg5[%c0_20, %c0_21] : memref<128x128xf32, #tpu.memory_space<vmem>>, vector<16x128xf32>
      %c16 = arith.constant 16 : index
      %c0_22 = arith.constant 0 : index
      %22 = vector.load %arg5[%c16, %c0_22] : memref<128x128xf32, #tpu.memory_space<vmem>>, vector<16x128xf32>
      %23 = arith.addf %21, %22 : vector<16x128xf32>
      %c0_23 = arith.constant 0 : index
      %c0_24 = arith.constant 0 : index
      %24 = vector.load %arg5[%c0_23, %c0_24] : memref<128x128xf32, #tpu.memory_space<vmem>>, vector<16x128xf32>
      tpu.vector_store %arg5[%c0_23, %c0_24], %23 {strides = array<i32>} : memref<128x128xf32, #tpu.memory_space<vmem>>, vector<16x128xf32>,
      %c0_25 = arith.constant 0 : index
      %c0_26 = arith.constant 0 : index
      %25 = vector.load %arg5[%c0_25, %c0_26] : memref<128x128xf32, #tpu.memory_space<vmem>>, vector<8x128xf32>
      %c8 = arith.constant 8 : index
      %c0_27 = arith.constant 0 : index
      %26 = vector.load %arg5[%c8, %c0_27] : memref<128x128xf32, #tpu.memory_space<vmem>>, vector<8x128xf32>
      %27 = arith.addf %25, %26 : vector<8x128xf32>
      %c0_28 = arith.constant 0 : index
      %c0_29 = arith.constant 0 : index
      %28 = vector.load %arg5[%c0_28, %c0_29] : memref<128x128xf32, #tpu.memory_space<vmem>>, vector<8x128xf32>
      tpu.vector_store %arg5[%c0_28, %c0_29], %27 {strides = array<i32>} : memref<128x128xf32, #tpu.memory_space<vmem>>, vector<8x128xf32>,
      %c0_30 = arith.constant 0 : index
      %c0_31 = arith.constant 0 : index
      %29 = vector.load %arg5[%c0_30, %c0_31] : memref<128x128xf32, #tpu.memory_space<vmem>>, vector<8x128xf32>
      %c0_32 = arith.constant 0 : index
      %c0_33 = arith.constant 0 : index
      %30 = vector.load %arg4[%c0_32, %c0_33] : memref<8x128xf32, #tpu.memory_space<vmem>>, vector<8x128xf32>
      tpu.vector_store %arg4[%c0_32, %c0_33], %29 {strides = array<i32>} : memref<8x128xf32, #tpu.memory_space<vmem>>, vector<8x128xf32>,
    } else {
    }
    return
  }
  func.func @transform_0(%arg0: i32, %arg1: i32) -> (i32, i32) {
    %c1_i32 = arith.constant 1 : i32
    %0 = arith.muli %arg0, %c1_i32 : i32
    %1 = arith.addi %0, %arg1 : i32
    %c0_i32 = arith.constant 0 : i32
    %c0_i32_0 = arith.constant 0 : i32
    return %1, %c0_i32 : i32, i32
  }
  func.func @transform_1(%arg0: i32, %arg1: i32) -> (i32, i32) {
    %c1_i32 = arith.constant 1 : i32
    %0 = arith.muli %arg0, %c1_i32 : i32
    %1 = arith.addi %0, %arg1 : i32
    %c0_i32 = arith.constant 0 : i32
    %c0_i32_0 = arith.constant 0 : i32
    return %1, %c0_i32 : i32, i32
  }
  func.func @transform_2(%arg0: i32, %arg1: i32) -> (i32, i32) {
    %c0_i32 = arith.constant 0 : i32
    %c0_i32_0 = arith.constant 0 : i32
    return %arg0, %c0_i32 : i32, i32
  }
}

</mosaic_0001>

<llo_original>
// kernel: rmse_loss.1
$region0: #{rmse_loss.1}
  #allocation0 [shape = 'u32[]', space=smem, size = 0x4, offset = 0x4, fixed_abs, tag = 'smem constant byte address 0x4 - core index']
  #allocation1 [shape = 'u32[72,128]{1,0:T(1,128)}', space=vmem, size = 0x9000, scoped, tag = 'internal scratch']
  #allocation2 [shape = 'f32[128,128]{1,0:T(8,128)}', space=vmem, size = 0x10000, scoped, tag = 'scratch operand']
  %s0 = inlined_call_operand.vmem [shape: f32[128,128], index: 0, kind: input, shape index: {}]
  %s1 = inlined_call_operand.vmem [shape: f32[128,128], index: 1, kind: input, shape index: {}]
  %s2 = inlined_call_operand.vmem [shape: f32[8,128], index: 2, kind: output, shape index: {}]
  %s3 = sld [smem:[#allocation0]]
  $region26: #{rmse_loss.1} parent=0
    _
  %s5 = ssub.s32 1, %s3
  %s6 = scalar_select 0, %s5, %s3
  // Predicated region
  $region2: #{rmse_loss.1} parent=0 // pred_check
    _
  $region3: #{rmse_loss.1} parent=0 // pred_check_branch
    %8 = sbr.rel (0) target = $region5
  $region4: #{rmse_loss.1} parent=0 // pred_region
    %s9 = sadd.s32 0, 0
    %s10 = smul.u32 16, %s9
    %p11 = scmp.lt.s32.totalorder %s10, 15
    %s12 = scalar_select %p11, %s10, 15
    %s13 = smul.addr %s12, 8
    %s14 = scalar_lea.vmem %s0, %s13
    %s15 = sadd.s32 0, 0
    %s16 = smul.u32 16, %s15
  $region5: #{rmse_loss.1} parent=0 // pred_fallthru
    _
  // Predicated region
  $region6: #{rmse_loss.1} parent=0 // pred_check
    _
  $region7: #{rmse_loss.1} parent=0 // pred_check_branch
    %18 = sbr.rel (0) target = $region9
  $region8: #{rmse_loss.1} parent=0 // pred_region
    %s19 = sadd.s32 0, 0
    %s20 = smul.u32 16, %s19
    %p21 = scmp.lt.s32.totalorder %s20, 15
    %s22 = scalar_select %p21, %s20, 15
    %s23 = smul.addr %s22, 8
    %s24 = scalar_lea.vmem %s1, %s23
    %s25 = sadd.s32 0, 0
    %s26 = smul.u32 16, %s25
  $region9: #{rmse_loss.1} parent=0 // pred_fallthru
    _
  %s27 = sadd.s32 0, 0
  %s28 = smul.u32 16, %s27
  %p29 = scmp.lt.s32.totalorder %s28, 15
  %s30 = scalar_select %p29, %s28, 15
  %s31 = smul.addr %s30, 8
  %s32 = scalar_lea.vmem %s0, %s31
  %s33 = sadd.s32 0, 0
  %s34 = smul.u32 16, %s33
  %p35 = scmp.lt.s32.totalorder %s34, 15
  %s36 = scalar_select %p35, %s34, 15
  %s37 = smul.addr %s36, 8
  %s38 = scalar_lea.vmem %s1, %s37
  %s39 = sadd.s32 0, 0
  %s40 = smul.u32 16, %s39
  %p41 = scmp.lt.s32.totalorder %s40, 15
  %s42 = scalar_select %p41, %s40, 15
  %s43 = smul.addr %s42, 8
  %s44 = scalar_lea.vmem %s0, %s43
  %s45 = sadd.s32 0, 0
  %s46 = smul.u32 16, %s45
  %s47 = sadd.s32 0, 0
  %s48 = smul.u32 16, %s47
  %p49 = scmp.lt.s32.totalorder %s48, 15
  %s50 = scalar_select %p49, %s48, 15
  %s51 = smul.addr %s50, 8
  %s52 = scalar_lea.vmem %s1, %s51
  %s53 = sadd.s32 0, 0
  %s54 = smul.u32 16, %s53
  %p55 = scmp.eq.s32.totalorder 0, 0
  // Predicated region
  $region10: #{rmse_loss.1} parent=0 // pred_check
    %p56 = pneg %p55
  $region11: #{rmse_loss.1} parent=0 // pred_check_branch
    %58 = sbr.rel (%p56) target = $region13
  $region12: #{rmse_loss.1} parent=0 // pred_region
    %59 = vst [vmem:[#allocation2] sm:$0xff] 0.0
    %60 = vst [vmem:[#allocation2 + $0x8] sm:$0xff] 0.0
    %61 = vst [vmem:[#allocation2 + $0x10] sm:$0xff] 0.0
    %62 = vst [vmem:[#allocation2 + $0x18] sm:$0xff] 0.0
    %63 = vst [vmem:[#allocation2 + $0x20] sm:$0xff] 0.0
    %64 = vst [vmem:[#allocation2 + $0x28] sm:$0xff] 0.0
    %65 = vst [vmem:[#allocation2 + $0x30] sm:$0xff] 0.0
    %66 = vst [vmem:[#allocation2 + $0x38] sm:$0xff] 0.0
    %67 = vst [vmem:[#allocation2 + $0x40] sm:$0xff] 0.0
    %68 = vst [vmem:[#allocation2 + $0x48] sm:$0xff] 0.0
    %69 = vst [vmem:[#allocation2 + $0x50] sm:$0xff] 0.0
    %70 = vst [vmem:[#allocation2 + $0x58] sm:$0xff] 0.0
    %71 = vst [vmem:[#allocation2 + $0x60] sm:$0xff] 0.0
    %72 = vst [vmem:[#allocation2 + $0x68] sm:$0xff] 0.0
    %73 = vst [vmem:[#allocation2 + $0x70] sm:$0xff] 0.0
    %74 = vst [vmem:[#allocation2 + $0x78] sm:$0xff] 0.0
  $region13: #{rmse_loss.1} parent=0 // pred_fallthru
    _
  %v75 = vld [vmem:[%s44] sm:$0xff]
  %v76 = vld [vmem:[%s44 + $0x8] sm:$0xff]
  %v77 = vld [vmem:[%s44 + $0x10] sm:$0xff]
  %v78 = vld [vmem:[%s44 + $0x18] sm:$0xff]
  %v79 = vld [vmem:[%s44 + $0x20] sm:$0xff]
  %v80 = vld [vmem:[%s44 + $0x28] sm:$0xff]
  %v81 = vld [vmem:[%s44 + $0x30] sm:$0xff]
  %v82 = vld [vmem:[%s44 + $0x38] sm:$0xff]
  %v83 = vld [vmem:[%s44 + $0x40] sm:$0xff]
  %v84 = vld [vmem:[%s44 + $0x48] sm:$0xff]
  %v85 = vld [vmem:[%s44 + $0x50] sm:$0xff]
  %v86 = vld [vmem:[%s44 + $0x58] sm:$0xff]
  %v87 = vld [vmem:[%s44 + $0x60] sm:$0xff]
  %v88 = vld [vmem:[%s44 + $0x68] sm:$0xff]
  %v89 = vld [vmem:[%s44 + $0x70] sm:$0xff]
  %v90 = vld [vmem:[%s44 + $0x78] sm:$0xff]
  %v91 = vld [vmem:[%s52] sm:$0xff]
  %v92 = vld [vmem:[%s52 + $0x8] sm:$0xff]
  %v93 = vld [vmem:[%s52 + $0x10] sm:$0xff]
  %v94 = vld [vmem:[%s52 + $0x18] sm:$0xff]
  %v95 = vld [vmem:[%s52 + $0x20] sm:$0xff]
  %v96 = vld [vmem:[%s52 + $0x28] sm:$0xff]
  %v97 = vld [vmem:[%s52 + $0x30] sm:$0xff]
  %v98 = vld [vmem:[%s52 + $0x38] sm:$0xff]
  %v99 = vld [vmem:[%s52 + $0x40] sm:$0xff]
  %v100 = vld [vmem:[%s52 + $0x48] sm:$0xff]
  %v101 = vld [vmem:[%s52 + $0x50] sm:$0xff]
  %v102 = vld [vmem:[%s52 + $0x58] sm:$0xff]
  %v103 = vld [vmem:[%s52 + $0x60] sm:$0xff]
  %v104 = vld [vmem:[%s52 + $0x68] sm:$0xff]
  %v105 = vld [vmem:[%s52 + $0x70] sm:$0xff]
  %v106 = vld [vmem:[%s52 + $0x78] sm:$0xff]
  %v107 = vsub.f32 %v75, %v91
  %v108 = vsub.f32 %v76, %v92
  %v109 = vsub.f32 %v77, %v93
  %v110 = vsub.f32 %v78, %v94
  %v111 = vsub.f32 %v79, %v95
  %v112 = vsub.f32 %v80, %v96
  %v113 = vsub.f32 %v81, %v97
  %v114 = vsub.f32 %v82, %v98
  %v115 = vsub.f32 %v83, %v99
  %v116 = vsub.f32 %v84, %v100
  %v117 = vsub.f32 %v85, %v101
  %v118 = vsub.f32 %v86, %v102
  %v119 = vsub.f32 %v87, %v103
  %v120 = vsub.f32 %v88, %v104
  %v121 = vsub.f32 %v89, %v105
  %v122 = vsub.f32 %v90, %v106
  %v123 = vld [vmem:[#allocation2] sm:$0xff]
  %v124 = vld [vmem:[#allocation2 + $0x8] sm:$0xff]
  %v125 = vld [vmem:[#allocation2 + $0x10] sm:$0xff]
  %v126 = vld [vmem:[#allocation2 + $0x18] sm:$0xff]
  %v127 = vld [vmem:[#allocation2 + $0x20] sm:$0xff]
  %v128 = vld [vmem:[#allocation2 + $0x28] sm:$0xff]
  %v129 = vld [vmem:[#allocation2 + $0x30] sm:$0xff]
  %v130 = vld [vmem:[#allocation2 + $0x38] sm:$0xff]
  %v131 = vld [vmem:[#allocation2 + $0x40] sm:$0xff]
  %v132 = vld [vmem:[#allocation2 + $0x48] sm:$0xff]
  %v133 = vld [vmem:[#allocation2 + $0x50] sm:$0xff]
  %v134 = vld [vmem:[#allocation2 + $0x58] sm:$0xff]
  %v135 = vld [vmem:[#allocation2 + $0x60] sm:$0xff]
  %v136 = vld [vmem:[#allocation2 + $0x68] sm:$0xff]
  %v137 = vld [vmem:[#allocation2 + $0x70] sm:$0xff]
  %v138 = vld [vmem:[#allocation2 + $0x78] sm:$0xff]
  %v139 = vmul.f32 %v107, %v107
  %v140 = vmul.f32 %v108, %v108
  %v141 = vmul.f32 %v109, %v109
  %v142 = vmul.f32 %v110, %v110
  %v143 = vmul.f32 %v111, %v111
  %v144 = vmul.f32 %v112, %v112
  %v145 = vmul.f32 %v113, %v113
  %v146 = vmul.f32 %v114, %v114
  %v147 = vmul.f32 %v115, %v115
  %v148 = vmul.f32 %v116, %v116
  %v149 = vmul.f32 %v117, %v117
  %v150 = vmul.f32 %v118, %v118
  %v151 = vmul.f32 %v119, %v119
  %v152 = vmul.f32 %v120, %v120
  %v153 = vmul.f32 %v121, %v121
  %v154 = vmul.f32 %v122, %v122
  %v155 = vadd.f32 %v123, %v139
  %v156 = vadd.f32 %v124, %v140
  %v157 = vadd.f32 %v125, %v141
  %v158 = vadd.f32 %v126, %v142
  %v159 = vadd.f32 %v127, %v143
  %v160 = vadd.f32 %v128, %v144
  %v161 = vadd.f32 %v129, %v145
  %v162 = vadd.f32 %v130, %v146
  %v163 = vadd.f32 %v131, %v147
  %v164 = vadd.f32 %v132, %v148
  %v165 = vadd.f32 %v133, %v149
  %v166 = vadd.f32 %v134, %v150
  %v167 = vadd.f32 %v135, %v151
  %v168 = vadd.f32 %v136, %v152
  %v169 = vadd.f32 %v137, %v153
  %v170 = vadd.f32 %v138, %v154
  %171 = vst [vmem:[#allocation2] sm:$0xff] %v155
  %172 = vst [vmem:[#allocation2 + $0x8] sm:$0xff] %v156
  %173 = vst [vmem:[#allocation2 + $0x10] sm:$0xff] %v157
  %174 = vst [vmem:[#allocation2 + $0x18] sm:$0xff] %v158
  %175 = vst [vmem:[#allocation2 + $0x20] sm:$0xff] %v159
  %176 = vst [vmem:[#allocation2 + $0x28] sm:$0xff] %v160
  %177 = vst [vmem:[#allocation2 + $0x30] sm:$0xff] %v161
  %178 = vst [vmem:[#allocation2 + $0x38] sm:$0xff] %v162
  %179 = vst [vmem:[#allocation2 + $0x40] sm:$0xff] %v163
  %180 = vst [vmem:[#allocation2 + $0x48] sm:$0xff] %v164
  %181 = vst [vmem:[#allocation2 + $0x50] sm:$0xff] %v165
  %182 = vst [vmem:[#allocation2 + $0x58] sm:$0xff] %v166
  %183 = vst [vmem:[#allocation2 + $0x60] sm:$0xff] %v167
  %184 = vst [vmem:[#allocation2 + $0x68] sm:$0xff] %v168
  %185 = vst [vmem:[#allocation2 + $0x70] sm:$0xff] %v169
  %186 = vst [vmem:[#allocation2 + $0x78] sm:$0xff] %v170
  // Predicated region
  $region14: #{rmse_loss.1} parent=0 // pred_check
    %p187 = pneg %p55
  $region15: #{rmse_loss.1} parent=0 // pred_check_branch
    %189 = sbr.rel (%p187) target = $region17
  $region16: #{rmse_loss.1} parent=0 // pred_region
    %v190 = vld [vmem:[#allocation2] sm:$0xff]
    %v191 = vld [vmem:[#allocation2 + $0x8] sm:$0xff]
    %v192 = vld [vmem:[#allocation2 + $0x10] sm:$0xff]
    %v193 = vld [vmem:[#allocation2 + $0x18] sm:$0xff]
    %v194 = vld [vmem:[#allocation2 + $0x20] sm:$0xff]
    %v195 = vld [vmem:[#allocation2 + $0x28] sm:$0xff]
    %v196 = vld [vmem:[#allocation2 + $0x30] sm:$0xff]
    %v197 = vld [vmem:[#allocation2 + $0x38] sm:$0xff]
    %v198 = vld [vmem:[#allocation2 + $0x40] sm:$0xff]
    %v199 = vld [vmem:[#allocation2 + $0x48] sm:$0xff]
    %v200 = vld [vmem:[#allocation2 + $0x50] sm:$0xff]
    %v201 = vld [vmem:[#allocation2 + $0x58] sm:$0xff]
    %v202 = vld [vmem:[#allocation2 + $0x60] sm:$0xff]
    %v203 = vld [vmem:[#allocation2 + $0x68] sm:$0xff]
    %v204 = vld [vmem:[#allocation2 + $0x70] sm:$0xff]
    %v205 = vld [vmem:[#allocation2 + $0x78] sm:$0xff]
    %v206 = vadd.f32 %v190, %v198
    %v207 = vadd.f32 %v191, %v199
    %v208 = vadd.f32 %v192, %v200
    %v209 = vadd.f32 %v193, %v201
    %v210 = vadd.f32 %v194, %v202
    %v211 = vadd.f32 %v195, %v203
    %v212 = vadd.f32 %v196, %v204
    %v213 = vadd.f32 %v197, %v205
    %214 = vst [vmem:[#allocation2] sm:$0xff] %v206
    %215 = vst [vmem:[#allocation2 + $0x8] sm:$0xff] %v207
    %216 = vst [vmem:[#allocation2 + $0x10] sm:$0xff] %v208
    %217 = vst [vmem:[#allocation2 + $0x18] sm:$0xff] %v209
    %218 = vst [vmem:[#allocation2 + $0x20] sm:$0xff] %v210
    %219 = vst [vmem:[#allocation2 + $0x28] sm:$0xff] %v211
    %220 = vst [vmem:[#allocation2 + $0x30] sm:$0xff] %v212
    %221 = vst [vmem:[#allocation2 + $0x38] sm:$0xff] %v213
    %v222 = vld [vmem:[#allocation2] sm:$0xff]
    %v223 = vld [vmem:[#allocation2 + $0x8] sm:$0xff]
    %v224 = vld [vmem:[#allocation2 + $0x10] sm:$0xff]
    %v225 = vld [vmem:[#allocation2 + $0x18] sm:$0xff]
    %v226 = vld [vmem:[#allocation2 + $0x20] sm:$0xff]
    %v227 = vld [vmem:[#allocation2 + $0x28] sm:$0xff]
    %v228 = vld [vmem:[#allocation2 + $0x30] sm:$0xff]
    %v229 = vld [vmem:[#allocation2 + $0x38] sm:$0xff]
    %v230 = vadd.f32 %v222, %v226
    %v231 = vadd.f32 %v223, %v227
    %v232 = vadd.f32 %v224, %v228
    %v233 = vadd.f32 %v225, %v229
    %234 = vst [vmem:[#allocation2] sm:$0xff] %v230
    %235 = vst [vmem:[#allocation2 + $0x8] sm:$0xff] %v231
    %236 = vst [vmem:[#allocation2 + $0x10] sm:$0xff] %v232
    %237 = vst [vmem:[#allocation2 + $0x18] sm:$0xff] %v233
    %v238 = vld [vmem:[#allocation2] sm:$0xff]
    %v239 = vld [vmem:[#allocation2 + $0x8] sm:$0xff]
    %v240 = vld [vmem:[#allocation2 + $0x10] sm:$0xff]
    %v241 = vld [vmem:[#allocation2 + $0x18] sm:$0xff]
    %v242 = vadd.f32 %v238, %v240
    %v243 = vadd.f32 %v239, %v241
    %244 = vst [vmem:[#allocation2] sm:$0xff] %v242
    %245 = vst [vmem:[#allocation2 + $0x8] sm:$0xff] %v243
    %v246 = vld [vmem:[#allocation2] sm:$0xff]
    %v247 = vld [vmem:[#allocation2 + $0x8] sm:$0xff]
    %v248 = vadd.f32 %v246, %v247
    %249 = vst [vmem:[#allocation2] sm:$0xff] %v248
    %v250 = vld [vmem:[#allocation2] sm:$0xff]
    %251 = vst [vmem:[%s2] sm:$0xff] %v250
  $region17: #{rmse_loss.1} parent=0 // pred_fallthru
    _
  // Predicated region
  $region18: #{rmse_loss.1} parent=0 // pred_check
    _
  $region19: #{rmse_loss.1} parent=0 // pred_check_branch
    %253 = sbr.rel (0) target = $region21
  $region20: #{rmse_loss.1} parent=0 // pred_region
    _
  $region21: #{rmse_loss.1} parent=0 // pred_fallthru
    _
  // Predicated region
  $region22: #{rmse_loss.1} parent=0 // pred_check
    _
  $region23: #{rmse_loss.1} parent=0 // pred_check_branch
    %255 = sbr.rel (0) target = $region25
  $region24: #{rmse_loss.1} parent=0 // pred_region
    _
  $region25: #{rmse_loss.1} parent=0 // pred_fallthru
    _

</llo_original>
